<compile_context>
chip_gen: v6e
topology: v6e:2x2x1
jax: 0.10.0
libtpu: 0.0.40
codegen_flags: <defaults>
</compile_context>

<pallas_src>
import functools

import jax
import jax.numpy as jnp
from jax.experimental import pallas as pl
from jax.experimental.pallas import tpu as pltpu


def _round_up(x, m):
    return ((x + m - 1) // m) * m


def _cdiv(a, b):
    return (a + b - 1) // b


def _patch_embed_kernel(p_ref, w_ref, b_ref, o_ref):
    # p_ref: (TM, Kp) compute dtype   w_ref: (Kp, Np) compute dtype
    # b_ref: (1, Np) f32              o_ref: (TM, Np) out dtype
    acc = jnp.dot(p_ref[...], w_ref[...], preferred_element_type=jnp.float32)
    o_ref[...] = (acc + b_ref[...]).astype(o_ref.dtype)


def patch_embed(x, weight, bias, kernel_size, stride, *,
                out_dtype=None, compute_dtype=jnp.bfloat16, tm_max=2048):
    """x: (B, C, H, W) NCHW; weight: (embed_dim, C, kh, kw); bias: (embed_dim,).

    Returns (B, Hp, Wp, embed_dim) — PatchEmbed.forward (conv + permute(0,2,3,1)).

    Numerics: operands are cast to `compute_dtype` (default bf16, native MXU
    rate) and accumulated in f32; `out_dtype` defaults to x.dtype (bf16
    recommended for memory-bound deployments).
    """
    assert tuple(kernel_size) == tuple(stride), "PatchEmbed assumes kernel_size == stride"
    kh, kw = kernel_size
    B, C, H, W = x.shape
    E = weight.shape[0]
    Hp, Wp = H // kh, W // kw
    # VALID-conv semantics: rows/cols that don't fill a full patch are dropped.
    if H != Hp * kh or W != Wp * kw:
        x = x[:, :, : Hp * kh, : Wp * kw]

    out_dtype = x.dtype if out_dtype is None else out_dtype

    # --- patch extraction: the cast fuses with the transpose copy under jit.
    xp = x.astype(compute_dtype).reshape(B, C, Hp, kh, Wp, kw)
    xp = jnp.transpose(xp, (0, 2, 4, 1, 3, 5))            # (B, Hp, Wp, C, kh, kw)
    patches = xp.reshape(B * Hp * Wp, C * kh * kw)        # (M, K)

    M, K = patches.shape
    N = E

    # Lane-aligned K and N: unmasked vld/vst and a fully fed MXU.
    # (No-op for ViT-B/16: K = 768, N = 768.)
    Kp = _round_up(K, 128)
    Np = _round_up(N, 128)

    # M tiling: large tiles amortize per-step overhead; keep >= 4 grid steps
    # when M allows so both v7x TensorCores get >= 2 steps each.
    TM = min(tm_max, _round_up(M, 8))
    TM = max(8, (TM // 8) * 8)
    while TM >= 512 and _cdiv(M, TM) < 4:
        TM //= 2
    Mp = _round_up(M, TM)

    if Mp != M or Kp != K:
        patches = jnp.pad(patches, ((0, Mp - M), (0, Kp - K)))

    w2d = weight.reshape(E, K).T.astype(compute_dtype)     # (K, E)
    b2d = bias.astype(jnp.float32).reshape(1, N)
    if Kp != K or Np != N:
        w2d = jnp.pad(w2d, ((0, Kp - K), (0, Np - N)))
    if Np != N:
        b2d = jnp.pad(b2d, ((0, 0), (0, Np - N)))

    grid = (Mp // TM,)

    cbytes = jnp.dtype(compute_dtype).itemsize
    obytes = jnp.dtype(out_dtype).itemsize

    # Double-buffered working set -> explicit scoped-VMEM limit (v5e default is
    # only 16 MiB); capped at 64 MiB so the same config is safe on v7x.
    working_set = (2 * TM * Kp * cbytes        # patch tiles (pipelined)
                   + 2 * Kp * Np * cbytes      # weight (resident, counted x2)
                   + 2 * Np * 4                # bias
                   + 2 * TM * Np * obytes)     # output tiles
    vmem_limit = int(min(max(32 * 1024 * 1024, working_set * 3 // 2 + (1 << 20)),
                         64 * 1024 * 1024))

    flops = 2 * Mp * Kp * Np
    bytes_accessed = (Mp * Kp * cbytes + Kp * Np * cbytes + Np * 4
                      + Mp * Np * obytes)

    out = pl.pallas_call(
        _patch_embed_kernel,
        out_shape=jax.ShapeDtypeStruct((Mp, Np), out_dtype),
        grid_spec=pltpu.PrefetchScalarGridSpec(
            num_scalar_prefetch=0,
            grid=grid,
            in_specs=[
                pl.BlockSpec((TM, Kp), lambda i: (i, 0)),   # patch tile: pipelined over M
                pl.BlockSpec((Kp, Np), lambda i: (0, 0)),   # weight: stays resident
                pl.BlockSpec((1, Np), lambda i: (0, 0)),    # bias: stays resident
            ],
            out_specs=pl.BlockSpec((TM, Np), lambda i: (i, 0)),
        ),
        compiler_params=pltpu.CompilerParams(
            dimension_semantics=("parallel",),
            vmem_limit_bytes=vmem_limit,
        ),
        cost_estimate=pl.CostEstimate(
            flops=int(flops), transcendentals=0, bytes_accessed=int(bytes_accessed)),
    )(patches, w2d, b2d)

    if Mp != M or Np != N:
        out = out[:M, :N]                                   # only if padding was added
    return out.reshape(B, Hp, Wp, E)


if __name__ == "__main__":
    # Small shapes consistent with the module (scaled down from 16x16 / 768).
    B, C, H, W = 2, 4, 16, 16
    kernel_size = stride = (8, 8)
    embed_dim = 32

    key = jax.random.PRNGKey(0)
    kx, kw_, kb = jax.random.split(key, 3)
    x = jax.random.normal(kx, (B, C, H, W), dtype=jnp.float32)
    weight = jax.random.normal(kw_, (embed_dim, C, *kernel_size), dtype=jnp.float32) * 0.02
    bias = jax.random.normal(kb, (embed_dim,), dtype=jnp.float32) * 0.02

    pe = jax.jit(functools.partial(patch_embed, kernel_size=kernel_size, stride=stride))
    out = jax.block_until_ready(pe(x, weight, bias))

    # Reference: exact-precision f32 conv on the same bf16-rounded operands
    # (the kernel uses bf16 MXU inputs with f32 accumulation), NCHW -> NHWC.
    x_r = x.astype(jnp.bfloat16).astype(jnp.float32)
    w_r = weight.astype(jnp.bfloat16).astype(jnp.float32)
    ref = jax.lax.conv_general_dilated(
        x_r, w_r, window_strides=stride, padding="VALID",
        dimension_numbers=("NCHW", "OIHW", "NCHW"),
        precision=jax.lax.Precision.HIGHEST,
    ) + bias[None, :, None, None]
    ref = jnp.transpose(ref, (0, 2, 3, 1))

    assert out.shape == (B, H // 8, W // 8, embed_dim), out.shape
    assert jnp.allclose(out, ref, atol=1e-3, rtol=1e-3), float(jnp.max(jnp.abs(out - ref)))

    print("KERNEL_OK")
</pallas_src>

<mosaic_0001>
module attributes {stable_mosaic.version = 11 : i64} {
  func.func @_patch_embed_kernel(%arg0: i32, %arg1: memref<8x256xbf16, #tpu.memory_space<vmem>>, %arg2: memref<256x128xbf16, #tpu.memory_space<vmem>>, %arg3: memref<1x128xf32, #tpu.memory_space<vmem>>, %arg4: memref<8x128xf32, #tpu.memory_space<vmem>>) attributes {dimension_semantics = [#tpu.dimension_semantics<parallel>], iteration_bounds = array<i64: 1>, scalar_prefetch = 0 : i64, scratch_operands = 0 : i64, tpu.core_type = #tpu.core_type<tc>, window_params = [{transform_indices = @transform_0, window_bounds = array<i64: 8, 256>}, {pipeline_mode = #tpu.pipeline_mode<synchronous>, transform_indices = @transform_1, window_bounds = array<i64: 256, 128>}, {pipeline_mode = #tpu.pipeline_mode<synchronous>, transform_indices = @transform_2, window_bounds = array<i64: 1, 128>}, {transform_indices = @transform_3, window_bounds = array<i64: 8, 128>}]} {
    %c0 = arith.constant 0 : index
    %c0_0 = arith.constant 0 : index
    %0 = vector.load %arg1[%c0, %c0_0] : memref<8x256xbf16, #tpu.memory_space<vmem>>, vector<8x256xbf16>
    %c0_1 = arith.constant 0 : index
    %c0_2 = arith.constant 0 : index
    %1 = vector.load %arg2[%c0_1, %c0_2] : memref<256x128xbf16, #tpu.memory_space<vmem>>, vector<256x128xbf16>
    %cst = arith.constant dense<0.000000e+00> : vector<8x128xf32>
    %2 = tpu.matmul %0, %1, %cst {dimension_numbers = #tpu.dot_dimension_numbers<[1], [0], [0], [1], [0, 0, 1, 1], [], []>} : vector<8x256xbf16>, vector<256x128xbf16>, vector<8x128xf32> -> vector<8x128xf32>
    %c0_3 = arith.constant 0 : index
    %c0_4 = arith.constant 0 : index
    %3 = vector.load %arg3[%c0_3, %c0_4] : memref<1x128xf32, #tpu.memory_space<vmem>>, vector<1x128xf32>
    %4 = vector.broadcast %3 : vector<1x128xf32> to vector<8x128xf32>
    %5 = arith.addf %2, %4 : vector<8x128xf32>
    %c0_5 = arith.constant 0 : index
    %c0_6 = arith.constant 0 : index
    %6 = vector.load %arg4[%c0_5, %c0_6] : memref<8x128xf32, #tpu.memory_space<vmem>>, vector<8x128xf32>
    tpu.vector_store %arg4[%c0_5, %c0_6], %5 {strides = array<i32>} : memref<8x128xf32, #tpu.memory_space<vmem>>, vector<8x128xf32>,
    return
  }
  func.func @transform_0(%arg0: i32) -> (i32, i32) {
    %c0_i32 = arith.constant 0 : i32
    %c0_i32_0 = arith.constant 0 : i32
    return %arg0, %c0_i32 : i32, i32
  }
  func.func @transform_1(%arg0: i32) -> (i32, i32) {
    %c0_i32 = arith.constant 0 : i32
    %c0_i32_0 = arith.constant 0 : i32
    %c0_i32_1 = arith.constant 0 : i32
    return %c0_i32, %c0_i32_0 : i32, i32
  }
  func.func @transform_2(%arg0: i32) -> (i32, i32) {
    %c0_i32 = arith.constant 0 : i32
    %c0_i32_0 = arith.constant 0 : i32
    %c0_i32_1 = arith.constant 0 : i32
    return %c0_i32, %c0_i32_0 : i32, i32
  }
  func.func @transform_3(%arg0: i32) -> (i32, i32) {
    %c0_i32 = arith.constant 0 : i32
    %c0_i32_0 = arith.constant 0 : i32
    return %arg0, %c0_i32 : i32, i32
  }
}

</mosaic_0001>

<llo_original>
// kernel: patch_embed.1
$region0: #{patch_embed.1}
  #allocation0 [shape = 'u32[]', space=smem, size = 0x4, offset = 0x4, fixed_abs, tag = 'smem constant byte address 0x4 - core index']
  #allocation1 [shape = 'u32[144,128]{1,0:T(1,128)}', space=vmem, size = 0x12000, scoped, tag = 'internal scratch']
  %s0 = inlined_call_operand.vmem [shape: bf16[8,256], index: 0, kind: input, shape index: {}]
  %s1 = inlined_call_operand.vmem [shape: bf16[256,128], index: 1, kind: input, shape index: {}]
  %s2 = inlined_call_operand.vmem [shape: f32[1,128], index: 2, kind: input, shape index: {}]
  %s3 = inlined_call_operand.hbm [shape: f32[8,128], index: 3, kind: output, shape index: {}]
  %s4 = sld [smem:[#allocation0]]
  $region22: #{patch_embed.1} parent=0
    _
  %s6 = ssub.s32 1, %s4
  %s7 = scalar_select 0, %s6, %s4
  $region1: #{patch_embed.1} parent=0
    #allocation2 [shape = 'u8[4096]{0}', space=vmem, size = 0x1000, scoped, tag = 'output window, operand 0, single buffered']
    #allocation3 [shape = 's32[1]{0}', space=sflag, size = 0x4, scoped, tag = 'scoped memory for patch_embed.1']
    %8 = vsyncpa [#allocation3], 0
    // Predicated region
    $region2: #{patch_embed.1} parent=1 // pred_check
      _
    $region3: #{patch_embed.1} parent=1 // pred_check_branch
      %10 = sbr.rel (0) target = $region5
    $region4: #{patch_embed.1} parent=1 // pred_region
      _
    $region5: #{patch_embed.1} parent=1 // pred_fallthru
      _
    // Predicated region
    $region6: #{patch_embed.1} parent=1 // pred_check
      _
    $region7: #{patch_embed.1} parent=1 // pred_check_branch
      %12 = sbr.rel (0) target = $region9
    $region8: #{patch_embed.1} parent=1 // pred_region
      _
    $region9: #{patch_embed.1} parent=1 // pred_fallthru
      _
    // Predicated region
    $region10: #{patch_embed.1} parent=1 // pred_check
      _
    $region11: #{patch_embed.1} parent=1 // pred_check_branch
      %14 = sbr.rel (0) target = $region13
    $region12: #{patch_embed.1} parent=1 // pred_region
      _
    $region13: #{patch_embed.1} parent=1 // pred_fallthru
      _
    %v16 = vld [vmem:[%s0] sm:$0xff]
    %v17 = vld [vmem:[%s1] sm:$0xf]
    %v18 = vld [vmem:[%s1 + $0x4] sm:$0xf]
    %v19 = vld [vmem:[%s1 + $0x8] sm:$0xf]
    %v20 = vld [vmem:[%s1 + $0xc] sm:$0xf]
    %v21 = vld [vmem:[%s1 + $0x10] sm:$0xf]
    %v22 = vld [vmem:[%s1 + $0x14] sm:$0xf]
    %v23 = vld [vmem:[%s1 + $0x18] sm:$0xf]
    %v24 = vld [vmem:[%s1 + $0x1c] sm:$0xf]
    %v25 = vld [vmem:[%s1 + $0x20] sm:$0xf]
    %v26 = vld [vmem:[%s1 + $0x24] sm:$0xf]
    %v27 = vld [vmem:[%s1 + $0x28] sm:$0xf]
    %v28 = vld [vmem:[%s1 + $0x2c] sm:$0xf]
    %v29 = vld [vmem:[%s1 + $0x30] sm:$0xf]
    %v30 = vld [vmem:[%s1 + $0x34] sm:$0xf]
    %v31 = vld [vmem:[%s1 + $0x38] sm:$0xf]
    %v32 = vld [vmem:[%s1 + $0x3c] sm:$0xf]
    %v33 = vld [vmem:[%s1 + $0x40] sm:$0xf]
    %v34 = vld [vmem:[%s1 + $0x44] sm:$0xf]
    %v35 = vld [vmem:[%s1 + $0x48] sm:$0xf]
    %v36 = vld [vmem:[%s1 + $0x4c] sm:$0xf]
    %v37 = vld [vmem:[%s1 + $0x50] sm:$0xf]
    %v38 = vld [vmem:[%s1 + $0x54] sm:$0xf]
    %v39 = vld [vmem:[%s1 + $0x58] sm:$0xf]
    %v40 = vld [vmem:[%s1 + $0x5c] sm:$0xf]
    %v41 = vld [vmem:[%s1 + $0x60] sm:$0xf]
    %v42 = vld [vmem:[%s1 + $0x64] sm:$0xf]
    %v43 = vld [vmem:[%s1 + $0x68] sm:$0xf]
    %v44 = vld [vmem:[%s1 + $0x6c] sm:$0xf]
    %v45 = vld [vmem:[%s1 + $0x70] sm:$0xf]
    %v46 = vld [vmem:[%s1 + $0x74] sm:$0xf]
    %v47 = vld [vmem:[%s1 + $0x78] sm:$0xf]
    %v48 = vld [vmem:[%s1 + $0x7c] sm:$0xf]
    %v49 = vld [vmem:[%s2] sm:$0x1]
    %v51 = vlaneseq
    %v52 = vshrl.u32 %v51, 7
    %v53 = vsub.s32 0, %v52
    %v54 = vrot.slane %v49, %v53
    %v57 = vunpack.c.l.b16 %v16
    %v58 = vunpack.c.h.b16 %v16
    %v59 = vpack.c.b16 %v57, %v57
    %v60 = vpack.c.b16 %v58, %v58
    %v95 = vunpack.c.l.b16 %v17
    %v96 = vunpack.c.l.b16 %v18
    %v97 = vunpack.c.l.b16 %v19
    %v98 = vunpack.c.l.b16 %v20
    %v99 = vunpack.c.l.b16 %v21
    %v100 = vunpack.c.l.b16 %v22
    %v101 = vunpack.c.l.b16 %v23
    %v102 = vunpack.c.l.b16 %v24
    %v103 = vunpack.c.l.b16 %v25
    %v104 = vunpack.c.l.b16 %v26
    %v105 = vunpack.c.l.b16 %v27
    %v106 = vunpack.c.l.b16 %v28
    %v107 = vunpack.c.l.b16 %v29
    %v108 = vunpack.c.l.b16 %v30
    %v109 = vunpack.c.l.b16 %v31
    %v110 = vunpack.c.l.b16 %v32
    %v111 = vunpack.c.l.b16 %v33
    %v112 = vunpack.c.l.b16 %v34
    %v113 = vunpack.c.l.b16 %v35
    %v114 = vunpack.c.l.b16 %v36
    %v115 = vunpack.c.l.b16 %v37
    %v116 = vunpack.c.l.b16 %v38
    %v117 = vunpack.c.l.b16 %v39
    %v118 = vunpack.c.l.b16 %v40
    %v119 = vunpack.c.l.b16 %v41
    %v120 = vunpack.c.l.b16 %v42
    %v121 = vunpack.c.l.b16 %v43
    %v122 = vunpack.c.l.b16 %v44
    %v123 = vunpack.c.l.b16 %v45
    %v124 = vunpack.c.l.b16 %v46
    %v125 = vunpack.c.l.b16 %v47
    %v126 = vunpack.c.l.b16 %v48
    %v127 = vpack.c.b16 %v96, %v95
    %v128 = vpack.c.b16 %v98, %v97
    %v129 = vpack.c.b16 %v100, %v99
    %v130 = vpack.c.b16 %v102, %v101
    %v131 = vpack.c.b16 %v104, %v103
    %v132 = vpack.c.b16 %v106, %v105
    %v133 = vpack.c.b16 %v108, %v107
    %v134 = vpack.c.b16 %v110, %v109
    %v135 = vpack.c.b16 %v112, %v111
    %v136 = vpack.c.b16 %v114, %v113
    %v137 = vpack.c.b16 %v116, %v115
    %v138 = vpack.c.b16 %v118, %v117
    %v139 = vpack.c.b16 %v120, %v119
    %v140 = vpack.c.b16 %v122, %v121
    %v141 = vpack.c.b16 %v124, %v123
    %v142 = vpack.c.b16 %v126, %v125
    %159 = vmatprep.subr.bf16.mxu0 0
    %160 = vmatpush1.bf16.msra.mxu0 %v134
    %161 = vmatprep.subr.bf16.mxu0 0
    %162 = vmatpush1.bf16.msra.mxu0 %v133
    %163 = vmatprep.subr.bf16.mxu0 0
    %164 = vmatpush1.bf16.msra.mxu0 %v132
    %165 = vmatprep.subr.bf16.mxu0 0
    %166 = vmatpush1.bf16.msra.mxu0 %v131
    %167 = vmatprep.subr.bf16.mxu0 0
    %168 = vmatpush1.bf16.msra.mxu0 %v130
    %169 = vmatprep.subr.bf16.mxu0 0
    %170 = vmatpush1.bf16.msra.mxu0 %v129
    %171 = vmatprep.subr.bf16.mxu0 0
    %172 = vmatpush1.bf16.msra.mxu0 %v128
    %173 = vmatprep.subr.bf16.mxu0 0
    %174 = vmatpush1.bf16.msra.mxu0 %v127
    %175 = vmatprep.subr.bf16.mxu0 0
    %176 = vmatpush2.bf16.msra.mxu0 %v142
    %177 = vmatprep.subr.bf16.mxu0 0
    %178 = vmatpush2.bf16.msra.mxu0 %v141
    %179 = vmatprep.subr.bf16.mxu0 0
    %180 = vmatpush2.bf16.msra.mxu0 %v140
    %181 = vmatprep.subr.bf16.mxu0 0
    %182 = vmatpush2.bf16.msra.mxu0 %v139
    %183 = vmatprep.subr.bf16.mxu0 0
    %184 = vmatpush2.bf16.msra.mxu0 %v138
    %185 = vmatprep.subr.bf16.mxu0 0
    %186 = vmatpush2.bf16.msra.mxu0 %v137
    %187 = vmatprep.subr.bf16.mxu0 0
    %188 = vmatpush2.bf16.msra.mxu0 %v136
    %189 = vmatprep.subr.bf16.mxu0 0
    %190 = vmatpush2.bf16.msra.mxu0 %v135
    %191 = vmatprep.mubr.bf16.mxu0 %v60
    %192 = vmatmul.mubr.bf16.gmra.mxu0 %v59
    %v193 = vpop.f32.mrf.mxu0
    %v194 = vadd.f32 %v54, %v193
    %v195 = vpop.f32.mrf.mxu0
    %v196 = vpop.f32.mrf.mxu0
    %v197 = vpop.f32.mrf.mxu0
    %198 = vdwg.mxu0
    %199 = vst [vmem:[#allocation2] sm:$0xff] %v194
    // Predicated region
    $region14: #{patch_embed.1} parent=1 // pred_check
      _
    $region15: #{patch_embed.1} parent=1 // pred_check_branch
      %201 = sbr.rel (0) target = $region17
    $region16: #{patch_embed.1} parent=1 // pred_region
      %s203 = ssub.s32 128, 128
      %204 = vsyncadd [#allocation3], %s203
      %s206 = sshll.u32 [#allocation2], 4
      %s207 = int_to_ptr.vmem [resolvable:$true] %s206
      %209 = dma.vmem_to_hbm [thread:$0]  %s207, 128, %s3, [#allocation3]
    $region17: #{patch_embed.1} parent=1 // pred_fallthru
      _
    // Predicated region
    $region18: #{patch_embed.1} parent=1 // pred_check
      _
    $region19: #{patch_embed.1} parent=1 // pred_check_branch
      %211 = sbr.rel (0) target = $region21
    $region20: #{patch_embed.1} parent=1 // pred_region
      %212 = dma.done [#allocation3], 128
    $region21: #{patch_embed.1} parent=1 // pred_fallthru
      _
    %213 = vsyncpa [#allocation3], 1

</llo_original>
